<compile_context>
chip_gen: v5e
topology: v5e:2x2
jax: 0.10.0
libtpu: 0.0.40
codegen_flags: <defaults>
</compile_context>

<pallas_src>
import jax
import jax.numpy as jnp
from jax import lax
from jax.experimental import pallas as pl
from jax.experimental.pallas import tpu as pltpu

# ---- small, module-consistent hyperparameters -------------------------------
B = 2                 # batch
H = W = 16            # spatial
C_IN = 4              # != 3  -> triggers the custom first conv in the module
STEM_OUT = 64         # resnet50 conv1 output channels
STEM_PAD = 128        # lane-dense padding of the stem channel dim
KH = KW = 7
STRIDE = 2
PAD = 3
EMB = 2048            # resnet50 embedding width (backbone.fc = Identity)
NUM_CLASSES = 3
OH = (H + 2 * PAD - KH) // STRIDE + 1
OW = (W + 2 * PAD - KW) // STRIDE + 1
S = OH * OW           # spatial positions after the stem conv (= 64), B*S = 128
K_RAW = C_IN * KH * KW        # 196
K_PAD = 256                   # contraction dim padded to a multiple of 128
CONF_PAD = 128                # lane-dense logits block (>= NUM_CLASSES)
FUSED_N = EMB + CONF_PAD      # 2176 = single fused output width (proj || folded cls)


# ---- Pallas kernels ----------------------------------------------------------
def _fused_full_kernel(patches_ref, wconv_ref, wfused_ref, bcls_ref,
                       conf_ref, emb_ref):
    # stem conv as im2col matmul (bf16 operands, f32 accumulation), then ReLU
    conv = jnp.dot(patches_ref[...], wconv_ref[...],
                   preferred_element_type=jnp.float32)            # (B*S, 128) f32
    conv = jnp.maximum(conv, 0.0)
    # global average pool: one reshape + sublane reduce (lane-dense, no slices/concat)
    pooled = jnp.mean(conv.reshape(B, S, STEM_PAD), axis=1)       # (B, 128) f32
    # single fused bf16 MXU call: [ w_proj | w_proj @ w_cls.T ]
    out = jnp.dot(pooled.astype(jnp.bfloat16), wfused_ref[...],
                  preferred_element_type=jnp.float32)             # (B, 2176) f32
    emb_ref[...] = out[:, :EMB]
    conf_ref[...] = out[:, EMB:] + bcls_ref[...]                  # lane-dense (B, 128)


def _fused_conf_kernel(patches_ref, wconv_ref, wcls_ref, bcls_ref, conf_ref):
    # conf-only path: no embedding output, no 2048-wide projection operand
    conv = jnp.dot(patches_ref[...], wconv_ref[...],
                   preferred_element_type=jnp.float32)            # (B*S, 128) f32
    conv = jnp.maximum(conv, 0.0)
    pooled = jnp.mean(conv.reshape(B, S, STEM_PAD), axis=1)       # (B, 128) f32
    conf_ref[...] = jnp.dot(pooled.astype(jnp.bfloat16), wcls_ref[...],
                            preferred_element_type=jnp.float32) + bcls_ref[...]


_VMEM_SPEC = pl.BlockSpec(memory_space=pltpu.MemorySpace.VMEM)

_full_call = pl.pallas_call(
    _fused_full_kernel,
    # no grid -> single invocation, whole arrays resident in VMEM, no double buffering
    in_specs=[_VMEM_SPEC] * 4,
    out_specs=(_VMEM_SPEC, _VMEM_SPEC),
    out_shape=(jax.ShapeDtypeStruct((B, CONF_PAD), jnp.float32),
               jax.ShapeDtypeStruct((B, EMB), jnp.float32)),
)

_conf_call = pl.pallas_call(
    _fused_conf_kernel,
    in_specs=[_VMEM_SPEC] * 4,
    out_specs=_VMEM_SPEC,
    out_shape=jax.ShapeDtypeStruct((B, CONF_PAD), jnp.float32),
)


# ---- glue: im2col + forward (jitted hot paths) --------------------------------
def _im2col_patches(x_nchw):
    # NHWC output spec -> patches land directly as (B, OH, OW, K); feature ordering is
    # (c, kh, kw) with c slowest (verified against the pure-JAX reference below).
    p = lax.conv_general_dilated_patches(
        x_nchw.astype(jnp.float32),
        filter_shape=(KH, KW),
        window_strides=(STRIDE, STRIDE),
        padding=((PAD, PAD), (PAD, PAD)),
        dimension_numbers=("NCHW", "OIHW", "NHWC"))               # (B, OH, OW, 196)
    p = p.reshape(B * S, K_RAW).astype(jnp.bfloat16)              # (B*S, 196) bf16
    return jnp.pad(p, ((0, 0), (0, K_PAD - K_RAW)))               # (B*S, 256) bf16


@jax.jit
def _forward_full_jit(x_nchw, packed):
    patches = _im2col_patches(x_nchw)
    conf_pad, emb = _full_call(patches, packed["w_conv_mat"],
                               packed["w_fused"], packed["b_cls_row"])
    return conf_pad[:, :NUM_CLASSES], emb


@jax.jit
def _forward_conf_jit(x_nchw, packed):
    patches = _im2col_patches(x_nchw)
    conf_pad = _conf_call(patches, packed["w_conv_mat"],
                          packed["w_cls_pooled"], packed["b_cls_row"])
    return conf_pad[:, :NUM_CLASSES]


def classification_model_forward(x_nchw, packed_params, return_embedding=False):
    if return_embedding:
        return _forward_full_jit(x_nchw, packed_params)
    return _forward_conf_jit(x_nchw, packed_params)


# ---- one-time parameter packing (outside the hot path) -----------------------
def pack_params(params):
    # PyTorch conv weight (O, I, KH, KW) -> ((c, kh, kw), O), pad K 196->256, O 64->128
    w_conv_mat = jnp.transpose(params["w_conv"], (1, 2, 3, 0)).reshape(K_RAW, STEM_OUT)
    w_conv_mat = jnp.pad(
        w_conv_mat, ((0, K_PAD - K_RAW), (0, STEM_PAD - STEM_OUT))).astype(jnp.bfloat16)
    # fold classifier into pooled space: (64, EMB) @ (EMB, NUM_CLASSES) -> pad to (128, 128)
    w_cls_fused = params["w_proj"] @ params["w_cls"].T
    w_cls_fused = jnp.pad(
        w_cls_fused, ((0, STEM_PAD - STEM_OUT), (0, CONF_PAD - NUM_CLASSES)))
    # single fused weight for the full path: [ w_proj (pad rows) | folded classifier ]
    w_proj_pad = jnp.pad(params["w_proj"], ((0, STEM_PAD - STEM_OUT), (0, 0)))
    w_fused = jnp.concatenate([w_proj_pad, w_cls_fused], axis=1).astype(jnp.bfloat16)
    b_cls_row = jnp.pad(params["b_cls"],
                        (0, CONF_PAD - NUM_CLASSES)).reshape(1, CONF_PAD).astype(jnp.float32)
    return {
        "w_conv_mat": w_conv_mat,                            # (256, 128) bf16
        "w_fused": w_fused,                                  # (128, 2176) bf16
        "w_cls_pooled": w_cls_fused.astype(jnp.bfloat16),    # (128, 128) bf16
        "b_cls_row": b_cls_row,                              # (1, 128) f32
    }


# ---- pure-JAX reference for correctness --------------------------------------
def _reference_forward(x_nchw, params):
    conv = lax.conv_general_dilated(
        x_nchw.astype(jnp.float32), params["w_conv"],
        window_strides=(STRIDE, STRIDE),
        padding=((PAD, PAD), (PAD, PAD)),
        dimension_numbers=("NCHW", "OIHW", "NCHW"))
    act = jnp.maximum(conv, 0.0)
    pooled = act.mean(axis=(2, 3))                               # (B, 64)
    emb = pooled @ params["w_proj"]                              # (B, EMB)
    conf = emb @ params["w_cls"].T + params["b_cls"]
    return conf, emb


def init_params(key):
    k1, k2, k3, k4 = jax.random.split(key, 4)
    return {
        # Conv2d(C_IN, 64, kernel_size=7, stride=2, padding=3, bias=False): weight (O,I,KH,KW)
        "w_conv": 0.05 * jax.random.normal(k1, (STEM_OUT, C_IN, KH, KW), jnp.float32),
        # synthetic 64 -> 2048 projection standing in for the resnet trunk
        "w_proj": 0.05 * jax.random.normal(k2, (STEM_OUT, EMB), jnp.float32),
        # cls = nn.Linear(2048, num_classes): weight (out, in), bias (out,)
        "w_cls": 0.02 * jax.random.normal(k3, (NUM_CLASSES, EMB), jnp.float32),
        "b_cls": 0.01 * jax.random.normal(k4, (NUM_CLASSES,), jnp.float32),
    }


if __name__ == "__main__":
    key = jax.random.PRNGKey(0)
    kx, kp = jax.random.split(key)
    x = jax.random.normal(kx, (B, C_IN, H, W), jnp.float32)      # NCHW, like PyTorch
    params = init_params(kp)
    packed = pack_params(params)                                 # one-time packing

    # full path (conf + embedding)
    conf, emb = classification_model_forward(x, packed, return_embedding=True)
    conf = jax.block_until_ready(conf)
    emb = jax.block_until_ready(emb)
    # conf-only fast path
    conf_only = jax.block_until_ready(
        classification_model_forward(x, packed, return_embedding=False))

    conf_ref, emb_ref = _reference_forward(x, params)
    assert conf.shape == (B, NUM_CLASSES) and emb.shape == (B, EMB)
    assert conf_only.shape == (B, NUM_CLASSES)
    # bf16 operands (f32 accumulation) + folded classifier -> loosened tolerance
    assert jnp.allclose(conf, conf_ref, rtol=5e-2, atol=1e-2)
    assert jnp.allclose(conf_only, conf_ref, rtol=5e-2, atol=1e-2)
    assert jnp.allclose(emb, emb_ref, rtol=5e-2, atol=1e-2)

    print("KERNEL_OK")
</pallas_src>

<mosaic_0001>
module attributes {stable_mosaic.version = 11 : i64} {
  func.func @_fused_full_kernel(%arg0: memref<128x256xbf16, #tpu.memory_space<vmem>>, %arg1: memref<256x128xbf16, #tpu.memory_space<vmem>>, %arg2: memref<128x2176xbf16, #tpu.memory_space<vmem>>, %arg3: memref<1x128xf32, #tpu.memory_space<vmem>>, %arg4: memref<2x128xf32, #tpu.memory_space<vmem>>, %arg5: memref<2x2048xf32, #tpu.memory_space<vmem>>) attributes {dimension_semantics = [], scalar_prefetch = 0 : i64, scratch_operands = 0 : i64, tpu.core_type = #tpu.core_type<tc>} {
    %c0 = arith.constant 0 : index
    %c0_0 = arith.constant 0 : index
    %0 = vector.load %arg0[%c0, %c0_0] : memref<128x256xbf16, #tpu.memory_space<vmem>>, vector<128x256xbf16>
    %c0_1 = arith.constant 0 : index
    %c0_2 = arith.constant 0 : index
    %1 = vector.load %arg1[%c0_1, %c0_2] : memref<256x128xbf16, #tpu.memory_space<vmem>>, vector<256x128xbf16>
    %cst = arith.constant dense<0.000000e+00> : vector<128x128xf32>
    %2 = tpu.matmul %0, %1, %cst {dimension_numbers = #tpu.dot_dimension_numbers<[1], [0], [0], [1], [0, 0, 1, 1], [], []>} : vector<128x256xbf16>, vector<256x128xbf16>, vector<128x128xf32> -> vector<128x128xf32>
    %cst_3 = arith.constant 0.000000e+00 : f32
    %3 = vector.broadcast %cst_3 : f32 to vector<128x128xf32>
    %4 = arith.maximumf %2, %3 : vector<128x128xf32>
    %5 = vector.shape_cast %4 : vector<128x128xf32> to vector<2x64x128xf32>
    %cst_4 = arith.constant dense<0.000000e+00> : vector<2x128xf32>
    %6 = vector.multi_reduction <add>, %5, %cst_4 [1] : vector<2x64x128xf32> to vector<2x128xf32>
    %cst_5 = arith.constant 6.400000e+01 : f32
    %7 = vector.broadcast %cst_5 : f32 to vector<2x128xf32>
    %8 = arith.divf %6, %7 : vector<2x128xf32>
    %9 = arith.truncf %8 : vector<2x128xf32> to vector<2x128xbf16>
    %c0_6 = arith.constant 0 : index
    %c0_7 = arith.constant 0 : index
    %10 = vector.load %arg2[%c0_6, %c0_7] : memref<128x2176xbf16, #tpu.memory_space<vmem>>, vector<128x2176xbf16>
    %cst_8 = arith.constant dense<0.000000e+00> : vector<2x2176xf32>
    %11 = tpu.matmul %9, %10, %cst_8 {dimension_numbers = #tpu.dot_dimension_numbers<[1], [0], [0], [1], [0, 0, 1, 1], [], []>} : vector<2x128xbf16>, vector<128x2176xbf16>, vector<2x2176xf32> -> vector<2x2176xf32>
    %12 = vector.extract_strided_slice %11 {offsets = [0, 0], sizes = [2, 2048], strides = [1, 1]} : vector<2x2176xf32> to vector<2x2048xf32>
    %c0_9 = arith.constant 0 : index
    %c0_10 = arith.constant 0 : index
    %13 = vector.load %arg5[%c0_9, %c0_10] : memref<2x2048xf32, #tpu.memory_space<vmem>>, vector<2x2048xf32>
    tpu.vector_store %arg5[%c0_9, %c0_10], %12 {strides = array<i32>} : memref<2x2048xf32, #tpu.memory_space<vmem>>, vector<2x2048xf32>,
    %14 = vector.extract_strided_slice %11 {offsets = [0, 2048], sizes = [2, 128], strides = [1, 1]} : vector<2x2176xf32> to vector<2x128xf32>
    %c0_11 = arith.constant 0 : index
    %c0_12 = arith.constant 0 : index
    %15 = vector.load %arg3[%c0_11, %c0_12] : memref<1x128xf32, #tpu.memory_space<vmem>>, vector<1x128xf32>
    %16 = vector.broadcast %15 : vector<1x128xf32> to vector<2x128xf32>
    %17 = arith.addf %14, %16 : vector<2x128xf32>
    %c0_13 = arith.constant 0 : index
    %c0_14 = arith.constant 0 : index
    %18 = vector.load %arg4[%c0_13, %c0_14] : memref<2x128xf32, #tpu.memory_space<vmem>>, vector<2x128xf32>
    tpu.vector_store %arg4[%c0_13, %c0_14], %17 {strides = array<i32>} : memref<2x128xf32, #tpu.memory_space<vmem>>, vector<2x128xf32>,
    return
  }
}

</mosaic_0001>

<llo_original>
// kernel: _forward_full_jit.1
$region0: #{_forward_full_jit.1}
  #allocation0 [shape = 'u32[]', space=smem, size = 0x4, offset = 0x4, fixed_abs, tag = 'smem constant byte address 0x4 - core index']
  #allocation1 [shape = 'u32[72,128]{1,0:T(1,128)}', space=vmem, size = 0x9000, scoped, tag = 'internal scratch']
  %s0 = inlined_call_operand.vmem [shape: bf16[128,256], index: 0, kind: input, shape index: {}]
  %s1 = inlined_call_operand.vmem [shape: bf16[256,128], index: 1, kind: input, shape index: {}]
  %s2 = inlined_call_operand.vmem [shape: bf16[128,2176], index: 2, kind: input, shape index: {}]
  %s3 = inlined_call_operand.vmem [shape: f32[1,128], index: 3, kind: input, shape index: {}]
  %s4 = inlined_call_operand.hbm [shape: f32[2,128], index: 4, kind: output, shape index: {0}]
  %s5 = inlined_call_operand.hbm [shape: f32[2,2048], index: 5, kind: output, shape index: {1}]
  %6 = xla_tuple %s4, %s5
  %s7 = sld [smem:[#allocation0]]
  $region34: #{_forward_full_jit.1} parent=0
    _
  %s9 = ssub.s32 1, %s7
  %s10 = scalar_select 0, %s9, %s7
  $region1: #{_forward_full_jit.1} parent=0
    #allocation2 [shape = 'u8[1024]{0}', space=vmem, size = 0x400, scoped, tag = 'output window, operand 0, single buffered']
    #allocation3 [shape = 's32[1]{0}', space=sflag, size = 0x4, scoped, tag = 'scoped memory for _forward_full_jit.1']
    #allocation4 [shape = 'u8[16384]{0}', space=vmem, size = 0x4000, scoped, tag = 'output window, operand 1, single buffered']
    #allocation5 [shape = 's32[1]{0}', space=sflag, size = 0x4, scoped, tag = 'scoped memory for _forward_full_jit.1']
    %11 = vsyncpa [#allocation3], 0
    %12 = vsyncpa [#allocation5], 0
    // Predicated region
    $region2: #{_forward_full_jit.1} parent=1 // pred_check
      _
    $region3: #{_forward_full_jit.1} parent=1 // pred_check_branch
      %14 = sbr.rel (0) target = $region5
    $region4: #{_forward_full_jit.1} parent=1 // pred_region
      _
    $region5: #{_forward_full_jit.1} parent=1 // pred_fallthru
      _
    // Predicated region
    $region6: #{_forward_full_jit.1} parent=1 // pred_check
      _
    $region7: #{_forward_full_jit.1} parent=1 // pred_check_branch
      %16 = sbr.rel (0) target = $region9
    $region8: #{_forward_full_jit.1} parent=1 // pred_region
      _
    $region9: #{_forward_full_jit.1} parent=1 // pred_fallthru
      _
    // Predicated region
    $region10: #{_forward_full_jit.1} parent=1 // pred_check
      _
    $region11: #{_forward_full_jit.1} parent=1 // pred_check_branch
      %18 = sbr.rel (0) target = $region13
    $region12: #{_forward_full_jit.1} parent=1 // pred_region
      _
    $region13: #{_forward_full_jit.1} parent=1 // pred_fallthru
      _
    // Predicated region
    $region14: #{_forward_full_jit.1} parent=1 // pred_check
      _
    $region15: #{_forward_full_jit.1} parent=1 // pred_check_branch
      %20 = sbr.rel (0) target = $region17
    $region16: #{_forward_full_jit.1} parent=1 // pred_region
      _
    $region17: #{_forward_full_jit.1} parent=1 // pred_fallthru
      _
    %v21 = vld [vmem:[%s0] sm:$0xff]
    %v22 = vld [vmem:[%s0 + $0x8] sm:$0xff]
    %v23 = vld [vmem:[%s0 + $0x10] sm:$0xff]
    %v24 = vld [vmem:[%s0 + $0x18] sm:$0xff]
    %v25 = vld [vmem:[%s0 + $0x20] sm:$0xff]
    %v26 = vld [vmem:[%s0 + $0x28] sm:$0xff]
    %v27 = vld [vmem:[%s0 + $0x30] sm:$0xff]
    %v28 = vld [vmem:[%s0 + $0x38] sm:$0xff]
    %v29 = vld [vmem:[%s0 + $0x40] sm:$0xff]
    %v30 = vld [vmem:[%s0 + $0x48] sm:$0xff]
    %v31 = vld [vmem:[%s0 + $0x50] sm:$0xff]
    %v32 = vld [vmem:[%s0 + $0x58] sm:$0xff]
    %v33 = vld [vmem:[%s0 + $0x60] sm:$0xff]
    %v34 = vld [vmem:[%s0 + $0x68] sm:$0xff]
    %v35 = vld [vmem:[%s0 + $0x70] sm:$0xff]
    %v36 = vld [vmem:[%s0 + $0x78] sm:$0xff]
    %v37 = vld [vmem:[%s1] sm:$0xf]
    %v38 = vld [vmem:[%s1 + $0x4] sm:$0xf]
    %v39 = vld [vmem:[%s1 + $0x8] sm:$0xf]
    %v40 = vld [vmem:[%s1 + $0xc] sm:$0xf]
    %v41 = vld [vmem:[%s1 + $0x10] sm:$0xf]
    %v42 = vld [vmem:[%s1 + $0x14] sm:$0xf]
    %v43 = vld [vmem:[%s1 + $0x18] sm:$0xf]
    %v44 = vld [vmem:[%s1 + $0x1c] sm:$0xf]
    %v45 = vld [vmem:[%s1 + $0x20] sm:$0xf]
    %v46 = vld [vmem:[%s1 + $0x24] sm:$0xf]
    %v47 = vld [vmem:[%s1 + $0x28] sm:$0xf]
    %v48 = vld [vmem:[%s1 + $0x2c] sm:$0xf]
    %v49 = vld [vmem:[%s1 + $0x30] sm:$0xf]
    %v50 = vld [vmem:[%s1 + $0x34] sm:$0xf]
    %v51 = vld [vmem:[%s1 + $0x38] sm:$0xf]
    %v52 = vld [vmem:[%s1 + $0x3c] sm:$0xf]
    %v53 = vld [vmem:[%s1 + $0x40] sm:$0xf]
    %v54 = vld [vmem:[%s1 + $0x44] sm:$0xf]
    %v55 = vld [vmem:[%s1 + $0x48] sm:$0xf]
    %v56 = vld [vmem:[%s1 + $0x4c] sm:$0xf]
    %v57 = vld [vmem:[%s1 + $0x50] sm:$0xf]
    %v58 = vld [vmem:[%s1 + $0x54] sm:$0xf]
    %v59 = vld [vmem:[%s1 + $0x58] sm:$0xf]
    %v60 = vld [vmem:[%s1 + $0x5c] sm:$0xf]
    %v61 = vld [vmem:[%s1 + $0x60] sm:$0xf]
    %v62 = vld [vmem:[%s1 + $0x64] sm:$0xf]
    %v63 = vld [vmem:[%s1 + $0x68] sm:$0xf]
    %v64 = vld [vmem:[%s1 + $0x6c] sm:$0xf]
    %v65 = vld [vmem:[%s1 + $0x70] sm:$0xf]
    %v66 = vld [vmem:[%s1 + $0x74] sm:$0xf]
    %v67 = vld [vmem:[%s1 + $0x78] sm:$0xf]
    %v68 = vld [vmem:[%s1 + $0x7c] sm:$0xf]
    %v85 = vunpack.c.l.b16 %v21
    %v86 = vunpack.c.h.b16 %v21
    %v87 = vunpack.c.l.b16 %v22
    %v88 = vunpack.c.h.b16 %v22
    %v89 = vunpack.c.l.b16 %v23
    %v90 = vunpack.c.h.b16 %v23
    %v91 = vunpack.c.l.b16 %v24
    %v92 = vunpack.c.h.b16 %v24
    %v93 = vunpack.c.l.b16 %v25
    %v94 = vunpack.c.h.b16 %v25
    %v95 = vunpack.c.l.b16 %v26
    %v96 = vunpack.c.h.b16 %v26
    %v97 = vunpack.c.l.b16 %v27
    %v98 = vunpack.c.h.b16 %v27
    %v99 = vunpack.c.l.b16 %v28
    %v100 = vunpack.c.h.b16 %v28
    %v101 = vunpack.c.l.b16 %v29
    %v102 = vunpack.c.h.b16 %v29
    %v103 = vunpack.c.l.b16 %v30
    %v104 = vunpack.c.h.b16 %v30
    %v105 = vunpack.c.l.b16 %v31
    %v106 = vunpack.c.h.b16 %v31
    %v107 = vunpack.c.l.b16 %v32
    %v108 = vunpack.c.h.b16 %v32
    %v109 = vunpack.c.l.b16 %v33
    %v110 = vunpack.c.h.b16 %v33
    %v111 = vunpack.c.l.b16 %v34
    %v112 = vunpack.c.h.b16 %v34
    %v113 = vunpack.c.l.b16 %v35
    %v114 = vunpack.c.h.b16 %v35
    %v115 = vunpack.c.l.b16 %v36
    %v116 = vunpack.c.h.b16 %v36
    %v117 = vpack.c.b16 %v87, %v85
    %v118 = vpack.c.b16 %v88, %v86
    %v119 = vpack.c.b16 %v91, %v89
    %v120 = vpack.c.b16 %v92, %v90
    %v121 = vpack.c.b16 %v95, %v93
    %v122 = vpack.c.b16 %v96, %v94
    %v123 = vpack.c.b16 %v99, %v97
    %v124 = vpack.c.b16 %v100, %v98
    %v125 = vpack.c.b16 %v103, %v101
    %v126 = vpack.c.b16 %v104, %v102
    %v127 = vpack.c.b16 %v107, %v105
    %v128 = vpack.c.b16 %v108, %v106
    %v129 = vpack.c.b16 %v111, %v109
    %v130 = vpack.c.b16 %v112, %v110
    %v131 = vpack.c.b16 %v115, %v113
    %v132 = vpack.c.b16 %v116, %v114
    %v181 = vunpack.c.l.b16 %v37
    %v182 = vunpack.c.l.b16 %v38
    %v183 = vunpack.c.l.b16 %v39
    %v184 = vunpack.c.l.b16 %v40
    %v185 = vunpack.c.l.b16 %v41
    %v186 = vunpack.c.l.b16 %v42
    %v187 = vunpack.c.l.b16 %v43
    %v188 = vunpack.c.l.b16 %v44
    %v189 = vunpack.c.l.b16 %v45
    %v190 = vunpack.c.l.b16 %v46
    %v191 = vunpack.c.l.b16 %v47
    %v192 = vunpack.c.l.b16 %v48
    %v193 = vunpack.c.l.b16 %v49
    %v194 = vunpack.c.l.b16 %v50
    %v195 = vunpack.c.l.b16 %v51
    %v196 = vunpack.c.l.b16 %v52
    %v197 = vunpack.c.l.b16 %v53
    %v198 = vunpack.c.l.b16 %v54
    %v199 = vunpack.c.l.b16 %v55
    %v200 = vunpack.c.l.b16 %v56
    %v201 = vunpack.c.l.b16 %v57
    %v202 = vunpack.c.l.b16 %v58
    %v203 = vunpack.c.l.b16 %v59
    %v204 = vunpack.c.l.b16 %v60
    %v205 = vunpack.c.l.b16 %v61
    %v206 = vunpack.c.l.b16 %v62
    %v207 = vunpack.c.l.b16 %v63
    %v208 = vunpack.c.l.b16 %v64
    %v209 = vunpack.c.l.b16 %v65
    %v210 = vunpack.c.l.b16 %v66
    %v211 = vunpack.c.l.b16 %v67
    %v212 = vunpack.c.l.b16 %v68
    %v213 = vpack.c.b16 %v182, %v181
    %v214 = vpack.c.b16 %v184, %v183
    %v215 = vpack.c.b16 %v186, %v185
    %v216 = vpack.c.b16 %v188, %v187
    %v217 = vpack.c.b16 %v190, %v189
    %v218 = vpack.c.b16 %v192, %v191
    %v219 = vpack.c.b16 %v194, %v193
    %v220 = vpack.c.b16 %v196, %v195
    %v221 = vpack.c.b16 %v198, %v197
    %v222 = vpack.c.b16 %v200, %v199
    %v223 = vpack.c.b16 %v202, %v201
    %v224 = vpack.c.b16 %v204, %v203
    %v225 = vpack.c.b16 %v206, %v205
    %v226 = vpack.c.b16 %v208, %v207
    %v227 = vpack.c.b16 %v210, %v209
    %v228 = vpack.c.b16 %v212, %v211
    %245 = vmatpush.bf16.msra.mxu0 %v220
    %246 = vmatpush.bf16.msra.mxu0 %v219
    %247 = vmatpush.bf16.msra.mxu0 %v218
    %248 = vmatpush.bf16.msra.mxu0 %v217
    %249 = vmatpush.bf16.msra.mxu0 %v216
    %250 = vmatpush.bf16.msra.mxu0 %v215
    %251 = vmatpush.bf16.msra.mxu0 %v214
    %252 = vmatpush.bf16.msra.mxu0 %v213
    %253 = vmatmul.bf16.gmra.mxu0 %v117
    %v254 = vpop.f32.mrf.mxu0
    %v255 = vadd.f32 0.0, %v254
    %v256 = vpop.f32.mrf.mxu0
    %v257 = vadd.f32 0.0, %v256
    %258 = vmatmul.bf16.gmra.mxu0 %v119
    %v259 = vpop.f32.mrf.mxu0
    %v260 = vadd.f32 0.0, %v259
    %v261 = vpop.f32.mrf.mxu0
    %v262 = vadd.f32 0.0, %v261
    %263 = vmatmul.bf16.gmra.mxu0 %v121
    %v264 = vpop.f32.mrf.mxu0
    %v265 = vadd.f32 0.0, %v264
    %v266 = vpop.f32.mrf.mxu0
    %v267 = vadd.f32 0.0, %v266
    %268 = vmatmul.bf16.gmra.mxu0 %v123
    %v269 = vpop.f32.mrf.mxu0
    %v270 = vadd.f32 0.0, %v269
    %v271 = vpop.f32.mrf.mxu0
    %v272 = vadd.f32 0.0, %v271
    %273 = vmatmul.bf16.gmra.mxu0 %v125
    %v274 = vpop.f32.mrf.mxu0
    %v275 = vadd.f32 0.0, %v274
    %v276 = vpop.f32.mrf.mxu0
    %v277 = vadd.f32 0.0, %v276
    %278 = vmatmul.bf16.gmra.mxu0 %v127
    %v279 = vpop.f32.mrf.mxu0
    %v280 = vadd.f32 0.0, %v279
    %v281 = vpop.f32.mrf.mxu0
    %v282 = vadd.f32 0.0, %v281
    %283 = vmatmul.bf16.gmra.mxu0 %v129
    %v284 = vpop.f32.mrf.mxu0
    %v285 = vadd.f32 0.0, %v284
    %v286 = vpop.f32.mrf.mxu0
    %v287 = vadd.f32 0.0, %v286
    %288 = vmatmul.bf16.gmra.mxu0 %v131
    %v289 = vpop.f32.mrf.mxu0
    %v290 = vadd.f32 0.0, %v289
    %v291 = vpop.f32.mrf.mxu0
    %v292 = vadd.f32 0.0, %v291
    %293 = vdwg.mxu0
    %294 = vmatpush.bf16.msra.mxu0 %v228
    %295 = vmatpush.bf16.msra.mxu0 %v227
    %296 = vmatpush.bf16.msra.mxu0 %v226
    %297 = vmatpush.bf16.msra.mxu0 %v225
    %298 = vmatpush.bf16.msra.mxu0 %v224
    %299 = vmatpush.bf16.msra.mxu0 %v223
    %300 = vmatpush.bf16.msra.mxu0 %v222
    %301 = vmatpush.bf16.msra.mxu0 %v221
    %302 = vmatmul.bf16.gmra.mxu0 %v118
    %v303 = vpop.f32.mrf.mxu0
    %v304 = vadd.f32 %v255, %v303
    %v305 = vpop.f32.mrf.mxu0
    %v306 = vadd.f32 %v257, %v305
    %307 = vmatmul.bf16.gmra.mxu0 %v120
    %v308 = vpop.f32.mrf.mxu0
    %v309 = vadd.f32 %v260, %v308
    %v310 = vpop.f32.mrf.mxu0
    %v311 = vadd.f32 %v262, %v310
    %312 = vmatmul.bf16.gmra.mxu0 %v122
    %v313 = vpop.f32.mrf.mxu0
    %v314 = vadd.f32 %v265, %v313
    %v315 = vpop.f32.mrf.mxu0
    %v316 = vadd.f32 %v267, %v315
    %317 = vmatmul.bf16.gmra.mxu0 %v124
    %v318 = vpop.f32.mrf.mxu0
    %v319 = vadd.f32 %v270, %v318
    %v320 = vpop.f32.mrf.mxu0
    %v321 = vadd.f32 %v272, %v320
    %322 = vmatmul.bf16.gmra.mxu0 %v126
    %v323 = vpop.f32.mrf.mxu0
    %v324 = vadd.f32 %v275, %v323
    %v325 = vpop.f32.mrf.mxu0
    %v326 = vadd.f32 %v277, %v325
    %327 = vmatmul.bf16.gmra.mxu0 %v128
    %v328 = vpop.f32.mrf.mxu0
    %v329 = vadd.f32 %v280, %v328
    %v330 = vpop.f32.mrf.mxu0
    %v331 = vadd.f32 %v282, %v330
    %332 = vmatmul.bf16.gmra.mxu0 %v130
    %v333 = vpop.f32.mrf.mxu0
    %v334 = vadd.f32 %v285, %v333
    %v335 = vpop.f32.mrf.mxu0
    %v336 = vadd.f32 %v287, %v335
    %337 = vmatmul.bf16.gmra.mxu0 %v132
    %v338 = vpop.f32.mrf.mxu0
    %v339 = vadd.f32 %v290, %v338
    %v340 = vpop.f32.mrf.mxu0
    %v341 = vadd.f32 %v292, %v340
    %342 = vdwg.mxu0
    %v343 = vmax.f32 %v304, 0.0
    %v344 = vmax.f32 %v306, 0.0
    %v345 = vmax.f32 %v309, 0.0
    %v346 = vmax.f32 %v311, 0.0
    %v347 = vmax.f32 %v314, 0.0
    %v348 = vmax.f32 %v316, 0.0
    %v349 = vmax.f32 %v319, 0.0
    %v350 = vmax.f32 %v321, 0.0
    %v351 = vmax.f32 %v324, 0.0
    %v352 = vmax.f32 %v326, 0.0
    %v353 = vmax.f32 %v329, 0.0
    %v354 = vmax.f32 %v331, 0.0
    %v355 = vmax.f32 %v334, 0.0
    %v356 = vmax.f32 %v336, 0.0
    %v357 = vmax.f32 %v339, 0.0
    %v358 = vmax.f32 %v341, 0.0
    %v359 = vadd.f32 %v343, %v344
    %v360 = vadd.f32 %v359, %v345
    %v361 = vadd.f32 %v360, %v346
    %v362 = vadd.f32 %v361, %v347
    %v363 = vadd.f32 %v362, %v348
    %v364 = vadd.f32 %v363, %v349
    %v365 = vadd.f32 %v364, %v350
    %v366 = vrot.slane %v365, 4
    %v367 = vadd.f32 %v365, %v366
    %v368 = vrot.slane %v367, 2
    %v369 = vadd.f32 %v367, %v368
    %v370 = vrot.slane %v369, 1
    %v371 = vadd.f32 %v369, %v370
    %v372 = vadd.f32 %v351, %v352
    %v373 = vadd.f32 %v372, %v353
    %v374 = vadd.f32 %v373, %v354
    %v375 = vadd.f32 %v374, %v355
    %v376 = vadd.f32 %v375, %v356
    %v377 = vadd.f32 %v376, %v357
    %v378 = vadd.f32 %v377, %v358
    %v379 = vrot.slane %v378, 4
    %v380 = vadd.f32 %v378, %v379
    %v381 = vrot.slane %v380, 2
    %v382 = vadd.f32 %v380, %v381
    %v383 = vrot.slane %v382, 1
    %v384 = vadd.f32 %v382, %v383
    %v385 = vrcp.pop 64.0
    %v386 = vmul.f32 64.0, %v385
    %v387 = vsub.f32 1.0, %v386
    %v388 = vmul.f32 %v385, %v387
    %v389 = vadd.f32 %v385, %v388
    %vm390 = vweird.f32 %v385
    %v391 = vsel %vm390, %v385, %v389
    %v392 = vmul.f32 %v371, %v391
    %v393 = vmul.f32 %v384, %v391
    %v394 = vpack.c.bf16 %v392, %v392
    %v395 = vpack.c.bf16 %v393, %v393
    %v396 = vld [vmem:[%s2] sm:$0xff]
    %v397 = vld [vmem:[%s2 + $0x8] sm:$0xff]
    %v398 = vld [vmem:[%s2 + $0x10] sm:$0xff]
    %v399 = vld [vmem:[%s2 + $0x18] sm:$0xff]
    %v400 = vld [vmem:[%s2 + $0x20] sm:$0xff]
    %v401 = vld [vmem:[%s2 + $0x28] sm:$0xff]
    %v402 = vld [vmem:[%s2 + $0x30] sm:$0xff]
    %v403 = vld [vmem:[%s2 + $0x38] sm:$0xff]
    %v404 = vld [vmem:[%s2 + $0x40] sm:$0xf]
    %v405 = vld [vmem:[%s2 + $0x44] sm:$0xff]
    %v406 = vld [vmem:[%s2 + $0x4c] sm:$0xff]
    %v407 = vld [vmem:[%s2 + $0x54] sm:$0xff]
    %v408 = vld [vmem:[%s2 + $0x5c] sm:$0xff]
    %v409 = vld [vmem:[%s2 + $0x64] sm:$0xff]
    %v410 = vld [vmem:[%s2 + $0x6c] sm:$0xff]
    %v411 = vld [vmem:[%s2 + $0x74] sm:$0xff]
    %v412 = vld [vmem:[%s2 + $0x7c] sm:$0xff]
    %v413 = vld [vmem:[%s2 + $0x84] sm:$0xf]
    %v414 = vld [vmem:[%s2 + $0x88] sm:$0xff]
    %v415 = vld [vmem:[%s2 + $0x90] sm:$0xff]
    %v416 = vld [vmem:[%s2 + $0x98] sm:$0xff]
    %v417 = vld [vmem:[%s2 + $0xa0] sm:$0xff]
    %v418 = vld [vmem:[%s2 + $0xa8] sm:$0xff]
    %v419 = vld [vmem:[%s2 + $0xb0] sm:$0xff]
    %v420 = vld [vmem:[%s2 + $0xb8] sm:$0xff]
    %v421 = vld [vmem:[%s2 + $0xc0] sm:$0xff]
    %v422 = vld [vmem:[%s2 + $0xc8] sm:$0xf]
    %v423 = vld [vmem:[%s2 + $0xcc] sm:$0xff]
    %v424 = vld [vmem:[%s2 + $0xd4] sm:$0xff]
    %v425 = vld [vmem:[%s2 + $0xdc] sm:$0xff]
    %v426 = vld [vmem:[%s2 + $0xe4] sm:$0xff]
    %v427 = vld [vmem:[%s2 + $0xec] sm:$0xff]
    %v428 = vld [vmem:[%s2 + $0xf4] sm:$0xff]
    %v429 = vld [vmem:[%s2 + $0xfc] sm:$0xff]
    %v430 = vld [vmem:[%s2 + $0x104] sm:$0xff]
    %v431 = vld [vmem:[%s2 + $0x10c] sm:$0xf]
    %v432 = vld [vmem:[%s2 + $0x110] sm:$0xff]
    %v433 = vld [vmem:[%s2 + $0x118] sm:$0xff]
    %v434 = vld [vmem:[%s2 + $0x120] sm:$0xff]
    %v435 = vld [vmem:[%s2 + $0x128] sm:$0xff]
    %v436 = vld [vmem:[%s2 + $0x130] sm:$0xff]
    %v437 = vld [vmem:[%s2 + $0x138] sm:$0xff]
    %v438 = vld [vmem:[%s2 + $0x140] sm:$0xff]
    %v439 = vld [vmem:[%s2 + $0x148] sm:$0xff]
    %v440 = vld [vmem:[%s2 + $0x150] sm:$0xf]
    %v441 = vld [vmem:[%s2 + $0x154] sm:$0xff]
    %v442 = vld [vmem:[%s2 + $0x15c] sm:$0xff]
    %v443 = vld [vmem:[%s2 + $0x164] sm:$0xff]
    %v444 = vld [vmem:[%s2 + $0x16c] sm:$0xff]
    %v445 = vld [vmem:[%s2 + $0x174] sm:$0xff]
    %v446 = vld [vmem:[%s2 + $0x17c] sm:$0xff]
    %v447 = vld [vmem:[%s2 + $0x184] sm:$0xff]
    %v448 = vld [vmem:[%s2 + $0x18c] sm:$0xff]
    %v449 = vld [vmem:[%s2 + $0x194] sm:$0xf]
    %v450 = vld [vmem:[%s2 + $0x198] sm:$0xff]
    %v451 = vld [vmem:[%s2 + $0x1a0] sm:$0xff]
    %v452 = vld [vmem:[%s2 + $0x1a8] sm:$0xff]
    %v453 = vld [vmem:[%s2 + $0x1b0] sm:$0xff]
    %v454 = vld [vmem:[%s2 + $0x1b8] sm:$0xff]
    %v455 = vld [vmem:[%s2 + $0x1c0] sm:$0xff]
    %v456 = vld [vmem:[%s2 + $0x1c8] sm:$0xff]
    %v457 = vld [vmem:[%s2 + $0x1d0] sm:$0xff]
    %v458 = vld [vmem:[%s2 + $0x1d8] sm:$0xf]
    %v459 = vld [vmem:[%s2 + $0x1dc] sm:$0xff]
    %v460 = vld [vmem:[%s2 + $0x1e4] sm:$0xff]
    %v461 = vld [vmem:[%s2 + $0x1ec] sm:$0xff]
    %v462 = vld [vmem:[%s2 + $0x1f4] sm:$0xff]
    %v463 = vld [vmem:[%s2 + $0x1fc] sm:$0xff]
    %v464 = vld [vmem:[%s2 + $0x204] sm:$0xff]
    %v465 = vld [vmem:[%s2 + $0x20c] sm:$0xff]
    %v466 = vld [vmem:[%s2 + $0x214] sm:$0xff]
    %v467 = vld [vmem:[%s2 + $0x21c] sm:$0xf]
    %v468 = vld [vmem:[%s2 + $0x220] sm:$0xff]
    %v469 = vld [vmem:[%s2 + $0x228] sm:$0xff]
    %v470 = vld [vmem:[%s2 + $0x230] sm:$0xff]
    %v471 = vld [vmem:[%s2 + $0x238] sm:$0xff]
    %v472 = vld [vmem:[%s2 + $0x240] sm:$0xff]
    %v473 = vld [vmem:[%s2 + $0x248] sm:$0xff]
    %v474 = vld [vmem:[%s2 + $0x250] sm:$0xff]
    %v475 = vld [vmem:[%s2 + $0x258] sm:$0xff]
    %v476 = vld [vmem:[%s2 + $0x260] sm:$0xf]
    %v477 = vld [vmem:[%s2 + $0x264] sm:$0xff]
    %v478 = vld [vmem:[%s2 + $0x26c] sm:$0xff]
    %v479 = vld [vmem:[%s2 + $0x274] sm:$0xff]
    %v480 = vld [vmem:[%s2 + $0x27c] sm:$0xff]
    %v481 = vld [vmem:[%s2 + $0x284] sm:$0xff]
    %v482 = vld [vmem:[%s2 + $0x28c] sm:$0xff]
    %v483 = vld [vmem:[%s2 + $0x294] sm:$0xff]
    %v484 = vld [vmem:[%s2 + $0x29c] sm:$0xff]
    %v485 = vld [vmem:[%s2 + $0x2a4] sm:$0xf]
    %v486 = vld [vmem:[%s2 + $0x2a8] sm:$0xff]
    %v487 = vld [vmem:[%s2 + $0x2b0] sm:$0xff]
    %v488 = vld [vmem:[%s2 + $0x2b8] sm:$0xff]
    %v489 = vld [vmem:[%s2 + $0x2c0] sm:$0xff]
    %v490 = vld [vmem:[%s2 + $0x2c8] sm:$0xff]
    %v491 = vld [vmem:[%s2 + $0x2d0] sm:$0xff]
    %v492 = vld [vmem:[%s2 + $0x2d8] sm:$0xff]
    %v493 = vld [vmem:[%s2 + $0x2e0] sm:$0xff]
    %v494 = vld [vmem:[%s2 + $0x2e8] sm:$0xf]
    %v495 = vld [vmem:[%s2 + $0x2ec] sm:$0xff]
    %v496 = vld [vmem:[%s2 + $0x2f4] sm:$0xff]
    %v497 = vld [vmem:[%s2 + $0x2fc] sm:$0xff]
    %v498 = vld [vmem:[%s2 + $0x304] sm:$0xff]
    %v499 = vld [vmem:[%s2 + $0x30c] sm:$0xff]
    %v500 = vld [vmem:[%s2 + $0x314] sm:$0xff]
    %v501 = vld [vmem:[%s2 + $0x31c] sm:$0xff]
    %v502 = vld [vmem:[%s2 + $0x324] sm:$0xff]
    %v503 = vld [vmem:[%s2 + $0x32c] sm:$0xf]
    %v504 = vld [vmem:[%s2 + $0x330] sm:$0xff]
    %v505 = vld [vmem:[%s2 + $0x338] sm:$0xff]
    %v506 = vld [vmem:[%s2 + $0x340] sm:$0xff]
    %v507 = vld [vmem:[%s2 + $0x348] sm:$0xff]
    %v508 = vld [vmem:[%s2 + $0x350] sm:$0xff]
    %v509 = vld [vmem:[%s2 + $0x358] sm:$0xff]
    %v510 = vld [vmem:[%s2 + $0x360] sm:$0xff]
    %v511 = vld [vmem:[%s2 + $0x368] sm:$0xff]
    %v512 = vld [vmem:[%s2 + $0x370] sm:$0xf]
    %v513 = vld [vmem:[%s2 + $0x374] sm:$0xff]
    %v514 = vld [vmem:[%s2 + $0x37c] sm:$0xff]
    %v515 = vld [vmem:[%s2 + $0x384] sm:$0xff]
    %v516 = vld [vmem:[%s2 + $0x38c] sm:$0xff]
    %v517 = vld [vmem:[%s2 + $0x394] sm:$0xff]
    %v518 = vld [vmem:[%s2 + $0x39c] sm:$0xff]
    %v519 = vld [vmem:[%s2 + $0x3a4] sm:$0xff]
    %v520 = vld [vmem:[%s2 + $0x3ac] sm:$0xff]
    %v521 = vld [vmem:[%s2 + $0x3b4] sm:$0xf]
    %v522 = vld [vmem:[%s2 + $0x3b8] sm:$0xff]
    %v523 = vld [vmem:[%s2 + $0x3c0] sm:$0xff]
    %v524 = vld [vmem:[%s2 + $0x3c8] sm:$0xff]
    %v525 = vld [vmem:[%s2 + $0x3d0] sm:$0xff]
    %v526 = vld [vmem:[%s2 + $0x3d8] sm:$0xff]
    %v527 = vld [vmem:[%s2 + $0x3e0] sm:$0xff]
    %v528 = vld [vmem:[%s2 + $0x3e8] sm:$0xff]
    %v529 = vld [vmem:[%s2 + $0x3f0] sm:$0xff]
    %v530 = vld [vmem:[%s2 + $0x3f8] sm:$0xf]
    %v531 = vld [vmem:[%s2 + $0x3fc] sm:$0xff]
    %v532 = vld [vmem:[%s2 + $0x404] sm:$0xff]
    %v533 = vld [vmem:[%s2 + $0x40c] sm:$0xff]
    %v534 = vld [vmem:[%s2 + $0x414] sm:$0xff]
    %v535 = vld [vmem:[%s2 + $0x41c] sm:$0xff]
    %v536 = vld [vmem:[%s2 + $0x424] sm:$0xff]
    %v537 = vld [vmem:[%s2 + $0x42c] sm:$0xff]
    %v538 = vld [vmem:[%s2 + $0x434] sm:$0xff]
    %v539 = vld [vmem:[%s2 + $0x43c] sm:$0xf]
    %v542 = vunpack.c.l.b16 %v394
    %v543 = vunpack.c.l.b16 %v395
    %vm544 = vcmask 1041409
    %v545 = vsel %vm544, %v543, %v542
    %v546 = vpack.c.b16 %v545, %v545
    %v692 = vunpack.c.l.b16 %v396
    %v693 = vunpack.c.h.b16 %v396
    %v694 = vunpack.c.l.b16 %v397
    %v695 = vunpack.c.h.b16 %v397
    %v696 = vunpack.c.l.b16 %v398
    %v697 = vunpack.c.h.b16 %v398
    %v698 = vunpack.c.l.b16 %v399
    %v699 = vunpack.c.h.b16 %v399
    %v700 = vunpack.c.l.b16 %v400
    %v701 = vunpack.c.h.b16 %v400
    %v702 = vunpack.c.l.b16 %v401
    %v703 = vunpack.c.h.b16 %v401
    %v704 = vunpack.c.l.b16 %v402
    %v705 = vunpack.c.h.b16 %v402
    %v706 = vunpack.c.l.b16 %v403
    %v707 = vunpack.c.h.b16 %v403
    %v708 = vunpack.c.l.b16 %v404
    %v709 = vunpack.c.l.b16 %v405
    %v710 = vunpack.c.h.b16 %v405
    %v711 = vunpack.c.l.b16 %v406
    %v712 = vunpack.c.h.b16 %v406
    %v713 = vunpack.c.l.b16 %v407
    %v714 = vunpack.c.h.b16 %v407
    %v715 = vunpack.c.l.b16 %v408
    %v716 = vunpack.c.h.b16 %v408
    %v717 = vunpack.c.l.b16 %v409
    %v718 = vunpack.c.h.b16 %v409
    %v719 = vunpack.c.l.b16 %v410
    %v720 = vunpack.c.h.b16 %v410
    %v721 = vunpack.c.l.b16 %v411
    %v722 = vunpack.c.h.b16 %v411
    %v723 = vunpack.c.l.b16 %v412
    %v724 = vunpack.c.h.b16 %v412
    %v725 = vunpack.c.l.b16 %v413
    %v726 = vunpack.c.l.b16 %v414
    %v727 = vunpack.c.h.b16 %v414
    %v728 = vunpack.c.l.b16 %v415
    %v729 = vunpack.c.h.b16 %v415
    %v730 = vunpack.c.l.b16 %v416
    %v731 = vunpack.c.h.b16 %v416
    %v732 = vunpack.c.l.b16 %v417
    %v733 = vunpack.c.h.b16 %v417
    %v734 = vunpack.c.l.b16 %v418
    %v735 = vunpack.c.h.b16 %v418
    %v736 = vunpack.c.l.b16 %v419
    %v737 = vunpack.c.h.b16 %v419
    %v738 = vunpack.c.l.b16 %v420
    %v739 = vunpack.c.h.b16 %v420
    %v740 = vunpack.c.l.b16 %v421
    %v741 = vunpack.c.h.b16 %v421
    %v742 = vunpack.c.l.b16 %v422
    %v743 = vunpack.c.l.b16 %v423
    %v744 = vunpack.c.h.b16 %v423
    %v745 = vunpack.c.l.b16 %v424
    %v746 = vunpack.c.h.b16 %v424
    %v747 = vunpack.c.l.b16 %v425
    %v748 = vunpack.c.h.b16 %v425
    %v749 = vunpack.c.l.b16 %v426
    %v750 = vunpack.c.h.b16 %v426
    %v751 = vunpack.c.l.b16 %v427
    %v752 = vunpack.c.h.b16 %v427
    %v753 = vunpack.c.l.b16 %v428
    %v754 = vunpack.c.h.b16 %v428
    %v755 = vunpack.c.l.b16 %v429
    %v756 = vunpack.c.h.b16 %v429
    %v757 = vunpack.c.l.b16 %v430
    %v758 = vunpack.c.h.b16 %v430
    %v759 = vunpack.c.l.b16 %v431
    %v760 = vunpack.c.l.b16 %v432
    %v761 = vunpack.c.h.b16 %v432
    %v762 = vunpack.c.l.b16 %v433
    %v763 = vunpack.c.h.b16 %v433
    %v764 = vunpack.c.l.b16 %v434
    %v765 = vunpack.c.h.b16 %v434
    %v766 = vunpack.c.l.b16 %v435
    %v767 = vunpack.c.h.b16 %v435
    %v768 = vunpack.c.l.b16 %v436
    %v769 = vunpack.c.h.b16 %v436
    %v770 = vunpack.c.l.b16 %v437
    %v771 = vunpack.c.h.b16 %v437
    %v772 = vunpack.c.l.b16 %v438
    %v773 = vunpack.c.h.b16 %v438
    %v774 = vunpack.c.l.b16 %v439
    %v775 = vunpack.c.h.b16 %v439
    %v776 = vunpack.c.l.b16 %v440
    %v777 = vunpack.c.l.b16 %v441
    %v778 = vunpack.c.h.b16 %v441
    %v779 = vunpack.c.l.b16 %v442
    %v780 = vunpack.c.h.b16 %v442
    %v781 = vunpack.c.l.b16 %v443
    %v782 = vunpack.c.h.b16 %v443
    %v783 = vunpack.c.l.b16 %v444
    %v784 = vunpack.c.h.b16 %v444
    %v785 = vunpack.c.l.b16 %v445
    %v786 = vunpack.c.h.b16 %v445
    %v787 = vunpack.c.l.b16 %v446
    %v788 = vunpack.c.h.b16 %v446
    %v789 = vunpack.c.l.b16 %v447
    %v790 = vunpack.c.h.b16 %v447
    %v791 = vunpack.c.l.b16 %v448
    %v792 = vunpack.c.h.b16 %v448
    %v793 = vunpack.c.l.b16 %v449
    %v794 = vunpack.c.l.b16 %v450
    %v795 = vunpack.c.h.b16 %v450
    %v796 = vunpack.c.l.b16 %v451
    %v797 = vunpack.c.h.b16 %v451
    %v798 = vunpack.c.l.b16 %v452
    %v799 = vunpack.c.h.b16 %v452
    %v800 = vunpack.c.l.b16 %v453
    %v801 = vunpack.c.h.b16 %v453
    %v802 = vunpack.c.l.b16 %v454
    %v803 = vunpack.c.h.b16 %v454
    %v804 = vunpack.c.l.b16 %v455
    %v805 = vunpack.c.h.b16 %v455
    %v806 = vunpack.c.l.b16 %v456
    %v807 = vunpack.c.h.b16 %v456
    %v808 = vunpack.c.l.b16 %v457
    %v809 = vunpack.c.h.b16 %v457
    %v810 = vunpack.c.l.b16 %v458
    %v811 = vunpack.c.l.b16 %v459
    %v812 = vunpack.c.h.b16 %v459
    %v813 = vunpack.c.l.b16 %v460
    %v814 = vunpack.c.h.b16 %v460
    %v815 = vunpack.c.l.b16 %v461
    %v816 = vunpack.c.h.b16 %v461
    %v817 = vunpack.c.l.b16 %v462
    %v818 = vunpack.c.h.b16 %v462
    %v819 = vunpack.c.l.b16 %v463
    %v820 = vunpack.c.h.b16 %v463
    %v821 = vunpack.c.l.b16 %v464
    %v822 = vunpack.c.h.b16 %v464
    %v823 = vunpack.c.l.b16 %v465
    %v824 = vunpack.c.h.b16 %v465
    %v825 = vunpack.c.l.b16 %v466
    %v826 = vunpack.c.h.b16 %v466
    %v827 = vunpack.c.l.b16 %v467
    %v828 = vunpack.c.l.b16 %v468
    %v829 = vunpack.c.h.b16 %v468
    %v830 = vunpack.c.l.b16 %v469
    %v831 = vunpack.c.h.b16 %v469
    %v832 = vunpack.c.l.b16 %v470
    %v833 = vunpack.c.h.b16 %v470
    %v834 = vunpack.c.l.b16 %v471
    %v835 = vunpack.c.h.b16 %v471
    %v836 = vunpack.c.l.b16 %v472
    %v837 = vunpack.c.h.b16 %v472
    %v838 = vunpack.c.l.b16 %v473
    %v839 = vunpack.c.h.b16 %v473
    %v840 = vunpack.c.l.b16 %v474
    %v841 = vunpack.c.h.b16 %v474
    %v842 = vunpack.c.l.b16 %v475
    %v843 = vunpack.c.h.b16 %v475
    %v844 = vunpack.c.l.b16 %v476
    %v845 = vunpack.c.l.b16 %v477
    %v846 = vunpack.c.h.b16 %v477
    %v847 = vunpack.c.l.b16 %v478
    %v848 = vunpack.c.h.b16 %v478
    %v849 = vunpack.c.l.b16 %v479
    %v850 = vunpack.c.h.b16 %v479
    %v851 = vunpack.c.l.b16 %v480
    %v852 = vunpack.c.h.b16 %v480
    %v853 = vunpack.c.l.b16 %v481
    %v854 = vunpack.c.h.b16 %v481
    %v855 = vunpack.c.l.b16 %v482
    %v856 = vunpack.c.h.b16 %v482
    %v857 = vunpack.c.l.b16 %v483
    %v858 = vunpack.c.h.b16 %v483
    %v859 = vunpack.c.l.b16 %v484
    %v860 = vunpack.c.h.b16 %v484
    %v861 = vunpack.c.l.b16 %v485
    %v862 = vunpack.c.l.b16 %v486
    %v863 = vunpack.c.h.b16 %v486
    %v864 = vunpack.c.l.b16 %v487
    %v865 = vunpack.c.h.b16 %v487
    %v866 = vunpack.c.l.b16 %v488
    %v867 = vunpack.c.h.b16 %v488
    %v868 = vunpack.c.l.b16 %v489
    %v869 = vunpack.c.h.b16 %v489
    %v870 = vunpack.c.l.b16 %v490
    %v871 = vunpack.c.h.b16 %v490
    %v872 = vunpack.c.l.b16 %v491
    %v873 = vunpack.c.h.b16 %v491
    %v874 = vunpack.c.l.b16 %v492
    %v875 = vunpack.c.h.b16 %v492
    %v876 = vunpack.c.l.b16 %v493
    %v877 = vunpack.c.h.b16 %v493
    %v878 = vunpack.c.l.b16 %v494
    %v879 = vunpack.c.l.b16 %v495
    %v880 = vunpack.c.h.b16 %v495
    %v881 = vunpack.c.l.b16 %v496
    %v882 = vunpack.c.h.b16 %v496
    %v883 = vunpack.c.l.b16 %v497
    %v884 = vunpack.c.h.b16 %v497
    %v885 = vunpack.c.l.b16 %v498
    %v886 = vunpack.c.h.b16 %v498
    %v887 = vunpack.c.l.b16 %v499
    %v888 = vunpack.c.h.b16 %v499
    %v889 = vunpack.c.l.b16 %v500
    %v890 = vunpack.c.h.b16 %v500
    %v891 = vunpack.c.l.b16 %v501
    %v892 = vunpack.c.h.b16 %v501
    %v893 = vunpack.c.l.b16 %v502
    %v894 = vunpack.c.h.b16 %v502
    %v895 = vunpack.c.l.b16 %v503
    %v896 = vunpack.c.l.b16 %v504
    %v897 = vunpack.c.h.b16 %v504
    %v898 = vunpack.c.l.b16 %v505
    %v899 = vunpack.c.h.b16 %v505
    %v900 = vunpack.c.l.b16 %v506
    %v901 = vunpack.c.h.b16 %v506
    %v902 = vunpack.c.l.b16 %v507
    %v903 = vunpack.c.h.b16 %v507
    %v904 = vunpack.c.l.b16 %v508
    %v905 = vunpack.c.h.b16 %v508
    %v906 = vunpack.c.l.b16 %v509
    %v907 = vunpack.c.h.b16 %v509
    %v908 = vunpack.c.l.b16 %v510
    %v909 = vunpack.c.h.b16 %v510
    %v910 = vunpack.c.l.b16 %v511
    %v911 = vunpack.c.h.b16 %v511
    %v912 = vunpack.c.l.b16 %v512
    %v913 = vunpack.c.l.b16 %v513
    %v914 = vunpack.c.h.b16 %v513
    %v915 = vunpack.c.l.b16 %v514
    %v916 = vunpack.c.h.b16 %v514
    %v917 = vunpack.c.l.b16 %v515
    %v918 = vunpack.c.h.b16 %v515
    %v919 = vunpack.c.l.b16 %v516
    %v920 = vunpack.c.h.b16 %v516
    %v921 = vunpack.c.l.b16 %v517
    %v922 = vunpack.c.h.b16 %v517
    %v923 = vunpack.c.l.b16 %v518
    %v924 = vunpack.c.h.b16 %v518
    %v925 = vunpack.c.l.b16 %v519
    %v926 = vunpack.c.h.b16 %v519
    %v927 = vunpack.c.l.b16 %v520
    %v928 = vunpack.c.h.b16 %v520
    %v929 = vunpack.c.l.b16 %v521
    %v930 = vunpack.c.l.b16 %v522
    %v931 = vunpack.c.h.b16 %v522
    %v932 = vunpack.c.l.b16 %v523
    %v933 = vunpack.c.h.b16 %v523
    %v934 = vunpack.c.l.b16 %v524
    %v935 = vunpack.c.h.b16 %v524
    %v936 = vunpack.c.l.b16 %v525
    %v937 = vunpack.c.h.b16 %v525
    %v938 = vunpack.c.l.b16 %v526
    %v939 = vunpack.c.h.b16 %v526
    %v940 = vunpack.c.l.b16 %v527
    %v941 = vunpack.c.h.b16 %v527
    %v942 = vunpack.c.l.b16 %v528
    %v943 = vunpack.c.h.b16 %v528
    %v944 = vunpack.c.l.b16 %v529
    %v945 = vunpack.c.h.b16 %v529
    %v946 = vunpack.c.l.b16 %v530
    %v947 = vunpack.c.l.b16 %v531
    %v948 = vunpack.c.h.b16 %v531
    %v949 = vunpack.c.l.b16 %v532
    %v950 = vunpack.c.h.b16 %v532
    %v951 = vunpack.c.l.b16 %v533
    %v952 = vunpack.c.h.b16 %v533
    %v953 = vunpack.c.l.b16 %v534
    %v954 = vunpack.c.h.b16 %v534
    %v955 = vunpack.c.l.b16 %v535
    %v956 = vunpack.c.h.b16 %v535
    %v957 = vunpack.c.l.b16 %v536
    %v958 = vunpack.c.h.b16 %v536
    %v959 = vunpack.c.l.b16 %v537
    %v960 = vunpack.c.h.b16 %v537
    %v961 = vunpack.c.l.b16 %v538
    %v962 = vunpack.c.h.b16 %v538
    %v963 = vunpack.c.l.b16 %v539
    %v964 = vpack.c.b16 %v709, %v692
    %v965 = vpack.c.b16 %v710, %v693
    %v966 = vpack.c.b16 %v711, %v694
    %v967 = vpack.c.b16 %v712, %v695
    %v968 = vpack.c.b16 %v713, %v696
    %v969 = vpack.c.b16 %v714, %v697
    %v970 = vpack.c.b16 %v715, %v698
    %v971 = vpack.c.b16 %v716, %v699
    %v972 = vpack.c.b16 %v717, %v700
    %v973 = vpack.c.b16 %v718, %v701
    %v974 = vpack.c.b16 %v719, %v702
    %v975 = vpack.c.b16 %v720, %v703
    %v976 = vpack.c.b16 %v721, %v704
    %v977 = vpack.c.b16 %v722, %v705
    %v978 = vpack.c.b16 %v723, %v706
    %v979 = vpack.c.b16 %v724, %v707
    %v980 = vpack.c.b16 %v725, %v708
    %v981 = vpack.c.b16 %v743, %v726
    %v982 = vpack.c.b16 %v744, %v727
    %v983 = vpack.c.b16 %v745, %v728
    %v984 = vpack.c.b16 %v746, %v729
    %v985 = vpack.c.b16 %v747, %v730
    %v986 = vpack.c.b16 %v748, %v731
    %v987 = vpack.c.b16 %v749, %v732
    %v988 = vpack.c.b16 %v750, %v733
    %v989 = vpack.c.b16 %v751, %v734
    %v990 = vpack.c.b16 %v752, %v735
    %v991 = vpack.c.b16 %v753, %v736
    %v992 = vpack.c.b16 %v754, %v737
    %v993 = vpack.c.b16 %v755, %v738
    %v994 = vpack.c.b16 %v756, %v739
    %v995 = vpack.c.b16 %v757, %v740
    %v996 = vpack.c.b16 %v758, %v741
    %v997 = vpack.c.b16 %v759, %v742
    %v998 = vpack.c.b16 %v777, %v760
    %v999 = vpack.c.b16 %v778, %v761
    %v1000 = vpack.c.b16 %v779, %v762
    %v1001 = vpack.c.b16 %v780, %v763
    %v1002 = vpack.c.b16 %v781, %v764
    %v1003 = vpack.c.b16 %v782, %v765
    %v1004 = vpack.c.b16 %v783, %v766
    %v1005 = vpack.c.b16 %v784, %v767
    %v1006 = vpack.c.b16 %v785, %v768
    %v1007 = vpack.c.b16 %v786, %v769
    %v1008 = vpack.c.b16 %v787, %v770
    %v1009 = vpack.c.b16 %v788, %v771
    %v1010 = vpack.c.b16 %v789, %v772
    %v1011 = vpack.c.b16 %v790, %v773
    %v1012 = vpack.c.b16 %v791, %v774
    %v1013 = vpack.c.b16 %v792, %v775
    %v1014 = vpack.c.b16 %v793, %v776
    %v1015 = vpack.c.b16 %v811, %v794
    %v1016 = vpack.c.b16 %v812, %v795
    %v1017 = vpack.c.b16 %v813, %v796
    %v1018 = vpack.c.b16 %v814, %v797
    %v1019 = vpack.c.b16 %v815, %v798
    %v1020 = vpack.c.b16 %v816, %v799
    %v1021 = vpack.c.b16 %v817, %v800
    %v1022 = vpack.c.b16 %v818, %v801
    %v1023 = vpack.c.b16 %v819, %v802
    %v1024 = vpack.c.b16 %v820, %v803
    %v1025 = vpack.c.b16 %v821, %v804
    %v1026 = vpack.c.b16 %v822, %v805
    %v1027 = vpack.c.b16 %v823, %v806
    %v1028 = vpack.c.b16 %v824, %v807
    %v1029 = vpack.c.b16 %v825, %v808
    %v1030 = vpack.c.b16 %v826, %v809
    %v1031 = vpack.c.b16 %v827, %v810
    %v1032 = vpack.c.b16 %v845, %v828
    %v1033 = vpack.c.b16 %v846, %v829
    %v1034 = vpack.c.b16 %v847, %v830
    %v1035 = vpack.c.b16 %v848, %v831
    %v1036 = vpack.c.b16 %v849, %v832
    %v1037 = vpack.c.b16 %v850, %v833
    %v1038 = vpack.c.b16 %v851, %v834
    %v1039 = vpack.c.b16 %v852, %v835
    %v1040 = vpack.c.b16 %v853, %v836
    %v1041 = vpack.c.b16 %v854, %v837
    %v1042 = vpack.c.b16 %v855, %v838
    %v1043 = vpack.c.b16 %v856, %v839
    %v1044 = vpack.c.b16 %v857, %v840
    %v1045 = vpack.c.b16 %v858, %v841
    %v1046 = vpack.c.b16 %v859, %v842
    %v1047 = vpack.c.b16 %v860, %v843
    %v1048 = vpack.c.b16 %v861, %v844
    %v1049 = vpack.c.b16 %v879, %v862
    %v1050 = vpack.c.b16 %v880, %v863
    %v1051 = vpack.c.b16 %v881, %v864
    %v1052 = vpack.c.b16 %v882, %v865
    %v1053 = vpack.c.b16 %v883, %v866
    %v1054 = vpack.c.b16 %v884, %v867
    %v1055 = vpack.c.b16 %v885, %v868
    %v1056 = vpack.c.b16 %v886, %v869
    %v1057 = vpack.c.b16 %v887, %v870
    %v1058 = vpack.c.b16 %v888, %v871
    %v1059 = vpack.c.b16 %v889, %v872
    %v1060 = vpack.c.b16 %v890, %v873
    %v1061 = vpack.c.b16 %v891, %v874
    %v1062 = vpack.c.b16 %v892, %v875
    %v1063 = vpack.c.b16 %v893, %v876
    %v1064 = vpack.c.b16 %v894, %v877
    %v1065 = vpack.c.b16 %v895, %v878
    %v1066 = vpack.c.b16 %v913, %v896
    %v1067 = vpack.c.b16 %v914, %v897
    %v1068 = vpack.c.b16 %v915, %v898
    %v1069 = vpack.c.b16 %v916, %v899
    %v1070 = vpack.c.b16 %v917, %v900
    %v1071 = vpack.c.b16 %v918, %v901
    %v1072 = vpack.c.b16 %v919, %v902
    %v1073 = vpack.c.b16 %v920, %v903
    %v1074 = vpack.c.b16 %v921, %v904
    %v1075 = vpack.c.b16 %v922, %v905
    %v1076 = vpack.c.b16 %v923, %v906
    %v1077 = vpack.c.b16 %v924, %v907
    %v1078 = vpack.c.b16 %v925, %v908
    %v1079 = vpack.c.b16 %v926, %v909
    %v1080 = vpack.c.b16 %v927, %v910
    %v1081 = vpack.c.b16 %v928, %v911
    %v1082 = vpack.c.b16 %v929, %v912
    %v1083 = vpack.c.b16 %v947, %v930
    %v1084 = vpack.c.b16 %v948, %v931
    %v1085 = vpack.c.b16 %v949, %v932
    %v1086 = vpack.c.b16 %v950, %v933
    %v1087 = vpack.c.b16 %v951, %v934
    %v1088 = vpack.c.b16 %v952, %v935
    %v1089 = vpack.c.b16 %v953, %v936
    %v1090 = vpack.c.b16 %v954, %v937
    %v1091 = vpack.c.b16 %v955, %v938
    %v1092 = vpack.c.b16 %v956, %v939
    %v1093 = vpack.c.b16 %v957, %v940
    %v1094 = vpack.c.b16 %v958, %v941
    %v1095 = vpack.c.b16 %v959, %v942
    %v1096 = vpack.c.b16 %v960, %v943
    %v1097 = vpack.c.b16 %v961, %v944
    %v1098 = vpack.c.b16 %v962, %v945
    %v1099 = vpack.c.b16 %v963, %v946
    %1236 = vmatpush.bf16.msra.mxu0 %v1083
    %1237 = vmatpush.bf16.msra.mxu0 %v1066
    %1238 = vmatpush.bf16.msra.mxu0 %v1049
    %1239 = vmatpush.bf16.msra.mxu0 %v1032
    %1240 = vmatpush.bf16.msra.mxu0 %v1015
    %1241 = vmatpush.bf16.msra.mxu0 %v998
    %1242 = vmatpush.bf16.msra.mxu0 %v981
    %1243 = vmatpush.bf16.msra.mxu0 %v964
    %1244 = vmatmul.bf16.gmra.mxu0 %v546
    %v1245 = vpop.f32.mrf.mxu0
    %v1246 = vadd.f32 0.0, %v1245
    %v1247 = vpop.f32.mrf.mxu0
    %1248 = vdwg.mxu0
    %1249 = vmatpush.bf16.msra.mxu0 %v1084
    %1250 = vmatpush.bf16.msra.mxu0 %v1067
    %1251 = vmatpush.bf16.msra.mxu0 %v1050
    %1252 = vmatpush.bf16.msra.mxu0 %v1033
    %1253 = vmatpush.bf16.msra.mxu0 %v1016
    %1254 = vmatpush.bf16.msra.mxu0 %v999
    %1255 = vmatpush.bf16.msra.mxu0 %v982
    %1256 = vmatpush.bf16.msra.mxu0 %v965
    %1257 = vmatmul.bf16.gmra.mxu0 %v546
    %v1258 = vpop.f32.mrf.mxu0
    %v1259 = vadd.f32 0.0, %v1258
    %v1260 = vpop.f32.mrf.mxu0
    %1261 = vdwg.mxu0
    %1262 = vmatpush.bf16.msra.mxu0 %v1085
    %1263 = vmatpush.bf16.msra.mxu0 %v1068
    %1264 = vmatpush.bf16.msra.mxu0 %v1051
    %1265 = vmatpush.bf16.msra.mxu0 %v1034
    %1266 = vmatpush.bf16.msra.mxu0 %v1017
    %1267 = vmatpush.bf16.msra.mxu0 %v1000
    %1268 = vmatpush.bf16.msra.mxu0 %v983
    %1269 = vmatpush.bf16.msra.mxu0 %v966
    %1270 = vmatmul.bf16.gmra.mxu0 %v546
    %v1271 = vpop.f32.mrf.mxu0
    %v1272 = vadd.f32 0.0, %v1271
    %v1273 = vpop.f32.mrf.mxu0
    %1274 = vdwg.mxu0
    %1275 = vmatpush.bf16.msra.mxu0 %v1086
    %1276 = vmatpush.bf16.msra.mxu0 %v1069
    %1277 = vmatpush.bf16.msra.mxu0 %v1052
    %1278 = vmatpush.bf16.msra.mxu0 %v1035
    %1279 = vmatpush.bf16.msra.mxu0 %v1018
    %1280 = vmatpush.bf16.msra.mxu0 %v1001
    %1281 = vmatpush.bf16.msra.mxu0 %v984
    %1282 = vmatpush.bf16.msra.mxu0 %v967
    %1283 = vmatmul.bf16.gmra.mxu0 %v546
    %v1284 = vpop.f32.mrf.mxu0
    %v1285 = vadd.f32 0.0, %v1284
    %v1286 = vpop.f32.mrf.mxu0
    %1287 = vdwg.mxu0
    %1288 = vmatpush.bf16.msra.mxu0 %v1087
    %1289 = vmatpush.bf16.msra.mxu0 %v1070
    %1290 = vmatpush.bf16.msra.mxu0 %v1053
    %1291 = vmatpush.bf16.msra.mxu0 %v1036
    %1292 = vmatpush.bf16.msra.mxu0 %v1019
    %1293 = vmatpush.bf16.msra.mxu0 %v1002
    %1294 = vmatpush.bf16.msra.mxu0 %v985
    %1295 = vmatpush.bf16.msra.mxu0 %v968
    %1296 = vmatmul.bf16.gmra.mxu0 %v546
    %v1297 = vpop.f32.mrf.mxu0
    %v1298 = vadd.f32 0.0, %v1297
    %v1299 = vpop.f32.mrf.mxu0
    %1300 = vdwg.mxu0
    %1301 = vmatpush.bf16.msra.mxu0 %v1088
    %1302 = vmatpush.bf16.msra.mxu0 %v1071
    %1303 = vmatpush.bf16.msra.mxu0 %v1054
    %1304 = vmatpush.bf16.msra.mxu0 %v1037
    %1305 = vmatpush.bf16.msra.mxu0 %v1020
    %1306 = vmatpush.bf16.msra.mxu0 %v1003
    %1307 = vmatpush.bf16.msra.mxu0 %v986
    %1308 = vmatpush.bf16.msra.mxu0 %v969
    %1309 = vmatmul.bf16.gmra.mxu0 %v546
    %v1310 = vpop.f32.mrf.mxu0
    %v1311 = vadd.f32 0.0, %v1310
    %v1312 = vpop.f32.mrf.mxu0
    %1313 = vdwg.mxu0
    %1314 = vmatpush.bf16.msra.mxu0 %v1089
    %1315 = vmatpush.bf16.msra.mxu0 %v1072
    %1316 = vmatpush.bf16.msra.mxu0 %v1055
    %1317 = vmatpush.bf16.msra.mxu0 %v1038
    %1318 = vmatpush.bf16.msra.mxu0 %v1021
    %1319 = vmatpush.bf16.msra.mxu0 %v1004
    %1320 = vmatpush.bf16.msra.mxu0 %v987
    %1321 = vmatpush.bf16.msra.mxu0 %v970
    %1322 = vmatmul.bf16.gmra.mxu0 %v546
    %v1323 = vpop.f32.mrf.mxu0
    %v1324 = vadd.f32 0.0, %v1323
    %v1325 = vpop.f32.mrf.mxu0
    %1326 = vdwg.mxu0
    %1327 = vmatpush.bf16.msra.mxu0 %v1090
    %1328 = vmatpush.bf16.msra.mxu0 %v1073
    %1329 = vmatpush.bf16.msra.mxu0 %v1056
    %1330 = vmatpush.bf16.msra.mxu0 %v1039
    %1331 = vmatpush.bf16.msra.mxu0 %v1022
    %1332 = vmatpush.bf16.msra.mxu0 %v1005
    %1333 = vmatpush.bf16.msra.mxu0 %v988
    %1334 = vmatpush.bf16.msra.mxu0 %v971
    %1335 = vmatmul.bf16.gmra.mxu0 %v546
    %v1336 = vpop.f32.mrf.mxu0
    %v1337 = vadd.f32 0.0, %v1336
    %v1338 = vpop.f32.mrf.mxu0
    %1339 = vdwg.mxu0
    %1340 = vmatpush.bf16.msra.mxu0 %v1091
    %1341 = vmatpush.bf16.msra.mxu0 %v1074
    %1342 = vmatpush.bf16.msra.mxu0 %v1057
    %1343 = vmatpush.bf16.msra.mxu0 %v1040
    %1344 = vmatpush.bf16.msra.mxu0 %v1023
    %1345 = vmatpush.bf16.msra.mxu0 %v1006
    %1346 = vmatpush.bf16.msra.mxu0 %v989
    %1347 = vmatpush.bf16.msra.mxu0 %v972
    %1348 = vmatmul.bf16.gmra.mxu0 %v546
    %v1349 = vpop.f32.mrf.mxu0
    %v1350 = vadd.f32 0.0, %v1349
    %v1351 = vpop.f32.mrf.mxu0
    %1352 = vdwg.mxu0
    %1353 = vmatpush.bf16.msra.mxu0 %v1092
    %1354 = vmatpush.bf16.msra.mxu0 %v1075
    %1355 = vmatpush.bf16.msra.mxu0 %v1058
    %1356 = vmatpush.bf16.msra.mxu0 %v1041
    %1357 = vmatpush.bf16.msra.mxu0 %v1024
    %1358 = vmatpush.bf16.msra.mxu0 %v1007
    %1359 = vmatpush.bf16.msra.mxu0 %v990
    %1360 = vmatpush.bf16.msra.mxu0 %v973
    %1361 = vmatmul.bf16.gmra.mxu0 %v546
    %v1362 = vpop.f32.mrf.mxu0
    %v1363 = vadd.f32 0.0, %v1362
    %v1364 = vpop.f32.mrf.mxu0
    %1365 = vdwg.mxu0
    %1366 = vmatpush.bf16.msra.mxu0 %v1093
    %1367 = vmatpush.bf16.msra.mxu0 %v1076
    %1368 = vmatpush.bf16.msra.mxu0 %v1059
    %1369 = vmatpush.bf16.msra.mxu0 %v1042
    %1370 = vmatpush.bf16.msra.mxu0 %v1025
    %1371 = vmatpush.bf16.msra.mxu0 %v1008
    %1372 = vmatpush.bf16.msra.mxu0 %v991
    %1373 = vmatpush.bf16.msra.mxu0 %v974
    %1374 = vmatmul.bf16.gmra.mxu0 %v546
    %v1375 = vpop.f32.mrf.mxu0
    %v1376 = vadd.f32 0.0, %v1375
    %v1377 = vpop.f32.mrf.mxu0
    %1378 = vdwg.mxu0
    %1379 = vmatpush.bf16.msra.mxu0 %v1094
    %1380 = vmatpush.bf16.msra.mxu0 %v1077
    %1381 = vmatpush.bf16.msra.mxu0 %v1060
    %1382 = vmatpush.bf16.msra.mxu0 %v1043
    %1383 = vmatpush.bf16.msra.mxu0 %v1026
    %1384 = vmatpush.bf16.msra.mxu0 %v1009
    %1385 = vmatpush.bf16.msra.mxu0 %v992
    %1386 = vmatpush.bf16.msra.mxu0 %v975
    %1387 = vmatmul.bf16.gmra.mxu0 %v546
    %v1388 = vpop.f32.mrf.mxu0
    %v1389 = vadd.f32 0.0, %v1388
    %v1390 = vpop.f32.mrf.mxu0
    %1391 = vdwg.mxu0
    %1392 = vmatpush.bf16.msra.mxu0 %v1095
    %1393 = vmatpush.bf16.msra.mxu0 %v1078
    %1394 = vmatpush.bf16.msra.mxu0 %v1061
    %1395 = vmatpush.bf16.msra.mxu0 %v1044
    %1396 = vmatpush.bf16.msra.mxu0 %v1027
    %1397 = vmatpush.bf16.msra.mxu0 %v1010
    %1398 = vmatpush.bf16.msra.mxu0 %v993
    %1399 = vmatpush.bf16.msra.mxu0 %v976
    %1400 = vmatmul.bf16.gmra.mxu0 %v546
    %v1401 = vpop.f32.mrf.mxu0
    %v1402 = vadd.f32 0.0, %v1401
    %v1403 = vpop.f32.mrf.mxu0
    %1404 = vdwg.mxu0
    %1405 = vmatpush.bf16.msra.mxu0 %v1096
    %1406 = vmatpush.bf16.msra.mxu0 %v1079
    %1407 = vmatpush.bf16.msra.mxu0 %v1062
    %1408 = vmatpush.bf16.msra.mxu0 %v1045
    %1409 = vmatpush.bf16.msra.mxu0 %v1028
    %1410 = vmatpush.bf16.msra.mxu0 %v1011
    %1411 = vmatpush.bf16.msra.mxu0 %v994
    %1412 = vmatpush.bf16.msra.mxu0 %v977
    %1413 = vmatmul.bf16.gmra.mxu0 %v546
    %v1414 = vpop.f32.mrf.mxu0
    %v1415 = vadd.f32 0.0, %v1414
    %v1416 = vpop.f32.mrf.mxu0
    %1417 = vdwg.mxu0
    %1418 = vmatpush.bf16.msra.mxu0 %v1097
    %1419 = vmatpush.bf16.msra.mxu0 %v1080
    %1420 = vmatpush.bf16.msra.mxu0 %v1063
    %1421 = vmatpush.bf16.msra.mxu0 %v1046
    %1422 = vmatpush.bf16.msra.mxu0 %v1029
    %1423 = vmatpush.bf16.msra.mxu0 %v1012
    %1424 = vmatpush.bf16.msra.mxu0 %v995
    %1425 = vmatpush.bf16.msra.mxu0 %v978
    %1426 = vmatmul.bf16.gmra.mxu0 %v546
    %v1427 = vpop.f32.mrf.mxu0
    %v1428 = vadd.f32 0.0, %v1427
    %v1429 = vpop.f32.mrf.mxu0
    %1430 = vdwg.mxu0
    %1431 = vmatpush.bf16.msra.mxu0 %v1098
    %1432 = vmatpush.bf16.msra.mxu0 %v1081
    %1433 = vmatpush.bf16.msra.mxu0 %v1064
    %1434 = vmatpush.bf16.msra.mxu0 %v1047
    %1435 = vmatpush.bf16.msra.mxu0 %v1030
    %1436 = vmatpush.bf16.msra.mxu0 %v1013
    %1437 = vmatpush.bf16.msra.mxu0 %v996
    %1438 = vmatpush.bf16.msra.mxu0 %v979
    %1439 = vmatmul.bf16.gmra.mxu0 %v546
    %v1440 = vpop.f32.mrf.mxu0
    %v1441 = vadd.f32 0.0, %v1440
    %v1442 = vpop.f32.mrf.mxu0
    %1443 = vdwg.mxu0
    %1444 = vmatpush.bf16.msra.mxu0 %v1099
    %1445 = vmatpush.bf16.msra.mxu0 %v1082
    %1446 = vmatpush.bf16.msra.mxu0 %v1065
    %1447 = vmatpush.bf16.msra.mxu0 %v1048
    %1448 = vmatpush.bf16.msra.mxu0 %v1031
    %1449 = vmatpush.bf16.msra.mxu0 %v1014
    %1450 = vmatpush.bf16.msra.mxu0 %v997
    %1451 = vmatpush.bf16.msra.mxu0 %v980
    %1452 = vmatmul.bf16.gmra.mxu0 %v546
    %v1453 = vpop.f32.mrf.mxu0
    %v1454 = vadd.f32 0.0, %v1453
    %v1455 = vpop.f32.mrf.mxu0
    %1456 = vdwg.mxu0
    %v1473 = vrot.slane %v1259, 6
    %v1474 = vrot.slane %v1272, 4
    %v1475 = vrot.slane %v1285, 2
    %v1476 = vrot.slane %v1311, 6
    %v1477 = vrot.slane %v1324, 4
    %v1478 = vrot.slane %v1337, 2
    %v1479 = vrot.slane %v1363, 6
    %v1480 = vrot.slane %v1376, 4
    %v1481 = vrot.slane %v1389, 2
    %v1482 = vrot.slane %v1415, 6
    %v1483 = vrot.slane %v1428, 4
    %v1484 = vrot.slane %v1441, 2
    %vm1485 = vcmask 1041408
    %v1486 = vsel %vm1485, %v1246, %v1473
    %vm1487 = vcmask 1045508
    %v1488 = vsel %vm1487, %v1474, %v1475
    %vm1489 = vcmask 1043456
    %v1490 = vsel %vm1489, %v1486, %v1488
    %v1491 = vsel %vm1485, %v1298, %v1476
    %v1492 = vsel %vm1487, %v1477, %v1478
    %v1493 = vsel %vm1489, %v1491, %v1492
    %v1494 = vsel %vm1485, %v1350, %v1479
    %v1495 = vsel %vm1487, %v1480, %v1481
    %v1496 = vsel %vm1489, %v1494, %v1495
    %v1497 = vsel %vm1485, %v1402, %v1482
    %v1498 = vsel %vm1487, %v1483, %v1484
    %v1499 = vsel %vm1489, %v1497, %v1498
    %1504 = vst [vmem:[#allocation4] sm:$0xff] %v1490
    %1505 = vst [vmem:[#allocation4 + $0x8] sm:$0xff] %v1493
    %1506 = vst [vmem:[#allocation4 + $0x10] sm:$0xff] %v1496
    %1507 = vst [vmem:[#allocation4 + $0x18] sm:$0xff] %v1499
    %v1508 = vld [vmem:[%s3] sm:$0x1]
    %v1510 = vperm.slane %v1508, 0
    %v1512 = vadd.f32 %v1454, %v1510
    %1513 = vst [vmem:[#allocation2] sm:$0x3] %v1512
    // Predicated region
    $region18: #{_forward_full_jit.1} parent=1 // pred_check
      _
    $region19: #{_forward_full_jit.1} parent=1 // pred_check_branch
      %1515 = sbr.rel (0) target = $region21
    $region20: #{_forward_full_jit.1} parent=1 // pred_region
      %1517 = vsyncadd [#allocation3], 0
      %s1519 = sshll.u32 [#allocation2], 4
      %s1520 = int_to_ptr.vmem [resolvable:$true] %s1519
      %s1521 = sshll.u32 %s4, 4
      %s1522 = int_to_ptr.hbm [resolvable:$true] %s1521
      %1524 = dma.vmem_to_hbm [thread:$0]  %s1520, 32, %s1522, [#allocation3]
    $region21: #{_forward_full_jit.1} parent=1 // pred_fallthru
      _
    // Predicated region
    $region22: #{_forward_full_jit.1} parent=1 // pred_check
      _
    $region23: #{_forward_full_jit.1} parent=1 // pred_check_branch
      %1526 = sbr.rel (0) target = $region25
    $region24: #{_forward_full_jit.1} parent=1 // pred_region
      %1528 = vsyncadd [#allocation5], 0
      %s1530 = sshll.u32 [#allocation4], 4
      %s1531 = int_to_ptr.vmem [resolvable:$true] %s1530
      %s1532 = sshll.u32 %s5, 4
      %s1533 = int_to_ptr.hbm [resolvable:$true] %s1532
      %1535 = dma.vmem_to_hbm [thread:$0]  %s1531, 512, %s1533, [#allocation5]
    $region25: #{_forward_full_jit.1} parent=1 // pred_fallthru
      _
    // Predicated region
    $region26: #{_forward_full_jit.1} parent=1 // pred_check
      _
    $region27: #{_forward_full_jit.1} parent=1 // pred_check_branch
      %1537 = sbr.rel (0) target = $region29
    $region28: #{_forward_full_jit.1} parent=1 // pred_region
      %1539 = dma.done [#allocation3], 32
    $region29: #{_forward_full_jit.1} parent=1 // pred_fallthru
      _
    // Predicated region
    $region30: #{_forward_full_jit.1} parent=1 // pred_check
      _
    $region31: #{_forward_full_jit.1} parent=1 // pred_check_branch
      %1541 = sbr.rel (0) target = $region33
    $region32: #{_forward_full_jit.1} parent=1 // pred_region
      %1543 = dma.done [#allocation5], 512
    $region33: #{_forward_full_jit.1} parent=1 // pred_fallthru
      _
    %1544 = vsyncpa [#allocation3], 1
    %1545 = vsyncpa [#allocation5], 1

</llo_original>
